<compile_context>
chip_gen: v7x
topology: tpu7x:2x2x1
jax: 0.10.0
libtpu: 0.0.40
codegen_flags: <defaults>
</compile_context>

<pallas_src>
import jax
import jax.numpy as jnp
from jax import lax
from jax.experimental import pallas as pl
from jax.experimental.pallas import tpu as pltpu

NEG_INF = -1e30


def _vmem_limit_bytes():
    # Re-derive per generation (v7x: 64 MiB/TC, v5e/v6e: 128 MiB); leave headroom.
    try:
        cap = int(pltpu.get_tpu_info().vmem_capacity_bytes)
    except Exception:
        cap = 64 * 1024 * 1024
    return max(32 * 1024 * 1024, min(cap * 3 // 4, 100 * 1024 * 1024))


VMEM_LIMIT = _vmem_limit_bytes()


# ----------------------------------------------------------------------------
# Row-tiled linear (bert_projection; also hidden2tag on the eval path)
# ----------------------------------------------------------------------------
def _linear_kernel(x_ref, w_ref, b_ref, o_ref):
    # x, w are bf16 (stored that way in params / produced by upstream kernels);
    # accumulate in f32, bias in f32.
    acc = jnp.dot(x_ref[...], w_ref[...], preferred_element_type=jnp.float32)
    o_ref[...] = (acc + b_ref[...]).astype(o_ref.dtype)


def linear(x, w, b, *, out_dtype=jnp.bfloat16, tm=256):
    # x: [N, Din] bf16, w: [Din, Dout] bf16, b: [1, Dout] f32 -> [N, Dout]
    N, Din = x.shape
    Dout = w.shape[1]
    # Keep >=2 row tiles when possible so the 'parallel' axis actually splits
    # across TensorCores on v7x and the x-tile DMA overlaps the matmul.
    tm_cap = max(8, ((N // 2) // 8) * 8) if N >= 16 else N
    tm = min(tm, tm_cap)
    # TODO(synk): mark w/b specs pipeline_mode=pl.Buffered(1) (constant block
    # index) once single-buffering is confirmed supported, to reclaim the dead
    # second weight buffer and allow a larger tm.
    return pl.pallas_call(
        _linear_kernel,
        out_shape=jax.ShapeDtypeStruct((N, Dout), out_dtype),
        grid=(pl.cdiv(N, tm),),
        in_specs=[pl.BlockSpec((tm, Din), lambda i: (i, 0)),
                  pl.BlockSpec((Din, Dout), lambda i: (0, 0)),   # resident weights
                  pl.BlockSpec((1, Dout), lambda i: (0, 0))],
        out_specs=pl.BlockSpec((tm, Dout), lambda i: (i, 0)),
        compiler_params=pltpu.CompilerParams(
            dimension_semantics=("parallel",),
            vmem_limit_bytes=VMEM_LIMIT),
    )(x, w, b)


# ----------------------------------------------------------------------------
# One bidirectional LSTM layer (PyTorch gate order i, f, g, o; zero init state).
# Input projections are hoisted out of the time loop; the recurrent fwd/bwd
# matmuls are fused into one block-diagonal MXU push per step; both directions
# are written into a single fused lane-dense [S, B, 2*Hh] bf16 output.
# ----------------------------------------------------------------------------
def _bilstm_layer_kernel(x_ref, wih_f_ref, wih_b_ref, whh_ref, b_f_ref, b_b_ref,
                         out_ref, gxf_ref, gxb_ref):
    S, B, Hin = x_ref.shape
    G = wih_f_ref.shape[1]          # 4*Hh
    Hh = G // 4

    # Hoisted input projections: one M = S*B matmul per direction (instead of
    # S matmuls with M = B on the serial dependence chain).
    x2d = x_ref[...].reshape(S * B, Hin)                       # bf16
    gxf_ref[...] = jnp.dot(x2d, wih_f_ref[...],
                           preferred_element_type=jnp.float32).reshape(S, B, G)
    gxb_ref[...] = jnp.dot(x2d, wih_b_ref[...],
                           preferred_element_type=jnp.float32).reshape(S, B, G)

    whh = whh_ref[...]                                         # [2Hh, 8Hh] bf16 block-diag
    b_f = jnp.broadcast_to(b_f_ref[...], (B, G))               # hoisted broadcasts
    b_b = jnp.broadcast_to(b_b_ref[...], (B, G))

    def gates_to_hc(gates, c):
        i_g = jax.nn.sigmoid(gates[:, 0 * Hh:1 * Hh])
        f_g = jax.nn.sigmoid(gates[:, 1 * Hh:2 * Hh])
        g_g = jnp.tanh(gates[:, 2 * Hh:3 * Hh])
        o_g = jax.nn.sigmoid(gates[:, 3 * Hh:4 * Hh])
        c_new = f_g * c + i_g * g_g
        h_new = o_g * jnp.tanh(c_new)
        return h_new, c_new

    zeros = jnp.zeros((B, Hh), jnp.float32)

    # TODO(synk): on v7x a size-2 'parallel' direction axis (one direction per
    # TensorCore) would use both cores; on 1-TC v5e/v6e the interleaved chains
    # below are the better schedule.
    def step(s, carry):
        h_f, c_f, h_b, c_b = carry
        t_b = S - 1 - s
        # One fused recurrent matmul for both directions (block-diagonal whh).
        h_cat = jnp.concatenate([h_f, h_b], axis=-1).astype(jnp.bfloat16)  # [B, 2Hh]
        hh = jnp.dot(h_cat, whh, preferred_element_type=jnp.float32)       # [B, 8Hh]
        h_f, c_f = gates_to_hc(gxf_ref[s] + hh[:, :G] + b_f, c_f)
        h_b, c_b = gates_to_hc(gxb_ref[t_b] + hh[:, G:] + b_b, c_b)
        out_ref[s, :, pl.ds(0, Hh)] = h_f.astype(out_ref.dtype)     # lane-half writes
        out_ref[t_b, :, pl.ds(Hh, Hh)] = h_b.astype(out_ref.dtype)  # (128-aligned when Hh==128)
        return h_f, c_f, h_b, c_b

    lax.fori_loop(0, S, step, (zeros, zeros, zeros, zeros),
                  unroll=min(4, max(S, 1)))


def bilstm_layer(x_tm, layer_params):
    # x_tm: [S, B, Hin] bf16; returns [S, B, 2*Hh] bf16
    # TODO(synk): for production S*B, stream x / gate scratches per time-chunk
    # from HBM (pl.ANY + double-buffered DMA); at these sizes the resident
    # block + interleaved recurrence is faster (no per-step grid cost).
    S, B, Hin = x_tm.shape
    wih_f, wih_b, whh_fused, b_f, b_b = layer_params
    Hh = whh_fused.shape[0] // 2
    G = 4 * Hh
    return pl.pallas_call(
        _bilstm_layer_kernel,
        out_shape=jax.ShapeDtypeStruct((S, B, 2 * Hh), jnp.bfloat16),
        grid=(1,),
        in_specs=[pl.BlockSpec((S, B, Hin), lambda i: (0, 0, 0)),
                  pl.BlockSpec((Hin, G), lambda i: (0, 0)),
                  pl.BlockSpec((Hin, G), lambda i: (0, 0)),
                  pl.BlockSpec((2 * Hh, 2 * G), lambda i: (0, 0)),
                  pl.BlockSpec((1, G), lambda i: (0, 0)),
                  pl.BlockSpec((1, G), lambda i: (0, 0))],
        out_specs=pl.BlockSpec((S, B, 2 * Hh), lambda i: (0, 0, 0)),
        scratch_shapes=[pltpu.VMEM((S, B, G), jnp.float32),
                        pltpu.VMEM((S, B, G), jnp.float32)],
        compiler_params=pltpu.CompilerParams(
            dimension_semantics=("arbitrary",),
            vmem_limit_bytes=VMEM_LIMIT),
    )(x_tm, wih_f, wih_b, whh_fused, b_f, b_b)


# ----------------------------------------------------------------------------
# Fused hidden2tag + CRF per-sequence log-likelihood (torchcrf semantics).
# Emissions are computed into a VMEM scratch with one matmul; the forward
# recursion uses the exp-space matmul form.  Label dim is padded to Lp=128
# lanes; phantom states carry -1e30 scores so exp_trans underflows to 0 and
# they never contribute.  Assumes mask[:, 0] == 1 (torchcrf rule).
# ----------------------------------------------------------------------------
def _tag_crf_kernel(x_ref, w_ref, b_ref, lbl_ref, mask_ref,
                    start_ref, end_ref, trans_ref, out_ref, em_ref):
    S, B, H = x_ref.shape
    Lp = w_ref.shape[1]

    # hidden2tag fused in: one [S*B, H] x [H, Lp] matmul; emissions stay on-chip.
    x2d = x_ref[...].reshape(S * B, H)                         # bf16
    em_ref[...] = (jnp.dot(x2d, w_ref[...], preferred_element_type=jnp.float32)
                   + b_ref[...]).reshape(S, B, Lp)

    start = start_ref[...]                                     # [1, Lp]
    end = end_ref[...]                                         # [1, Lp]
    trans = trans_ref[...]                                     # [Lp, Lp] f32 (i -> j)

    # Hoisted exp-space transition matrix (fold in max to avoid overflow;
    # exp(NEG_INF - max) underflows to 0 which preserves phantom semantics).
    tmax_col = jnp.max(trans, axis=1, keepdims=True)           # [Lp, 1]
    trans_max = jnp.max(tmax_col, axis=0, keepdims=True)       # [1, 1]
    exp_trans = jnp.exp(trans - trans_max)                     # [Lp, Lp]

    lane = lax.broadcasted_iota(jnp.int32, (B, Lp), 1)

    def one_hot(lbl):                                          # lbl: [B, 1] int32
        return (lane == lbl).astype(jnp.float32)               # [B, Lp]

    oh0 = one_hot(lbl_ref[0])
    em0 = em_ref[0]
    score0 = jnp.sum((start + em0) * oh0, axis=-1, keepdims=True)   # [B, 1]
    alpha0 = start + em0                                       # [B, Lp]

    def body(t, carry):
        score, alpha, prev_oh, last_oh = carry
        m_t = mask_ref[t]                                      # [B, 1] f32
        oh_t = one_hot(lbl_ref[t])                             # [B, Lp]
        em_t = em_ref[t]                                       # [B, Lp]

        # gold-path numerator: transitions[prev, cur] + emissions[cur]
        trans_row = jnp.dot(prev_oh, trans,
                            preferred_element_type=jnp.float32)        # [B, Lp]
        gold = jnp.sum((trans_row + em_t) * oh_t, axis=-1, keepdims=True)
        score = score + m_t * gold

        # partition function: exp-space matmul forward recursion
        m_b = jnp.max(alpha, axis=-1, keepdims=True)           # [B, 1]
        p = jnp.exp(alpha - m_b)                               # [B, Lp]
        s_mat = jnp.dot(p, exp_trans,
                        preferred_element_type=jnp.float32)    # [B, Lp]
        next_alpha = (m_b + trans_max
                      + jnp.maximum(jnp.log(s_mat), NEG_INF) + em_t)
        alpha = jnp.where(m_t > 0.0, next_alpha, alpha)

        last_oh = jnp.where(m_t > 0.0, oh_t, last_oh)
        return score, alpha, oh_t, last_oh

    score, alpha, _, last_oh = lax.fori_loop(
        1, S, body, (score0, alpha0, oh0, oh0),
        unroll=min(4, max(S - 1, 1)))

    score = score + jnp.sum(end * last_oh, axis=-1, keepdims=True)    # [B, 1]
    final = alpha + end
    m = jnp.max(final, axis=-1, keepdims=True)
    denom = m + jnp.log(jnp.sum(jnp.exp(final - m), axis=-1, keepdims=True))
    out_ref[...] = score - denom                               # per-sequence llh


def tag_crf_llh(x_tm, tag_w, tag_b, labels_tm, mask_tm, start, end, trans):
    S, B, H = x_tm.shape
    Lp = tag_w.shape[1]
    return pl.pallas_call(
        _tag_crf_kernel,
        out_shape=jax.ShapeDtypeStruct((B, 1), jnp.float32),
        grid=(1,),
        in_specs=[pl.BlockSpec((S, B, H), lambda i: (0, 0, 0)),
                  pl.BlockSpec((H, Lp), lambda i: (0, 0)),
                  pl.BlockSpec((1, Lp), lambda i: (0, 0)),
                  pl.BlockSpec((S, B, 1), lambda i: (0, 0, 0)),
                  pl.BlockSpec((S, B, 1), lambda i: (0, 0, 0)),
                  pl.BlockSpec((1, Lp), lambda i: (0, 0)),
                  pl.BlockSpec((1, Lp), lambda i: (0, 0)),
                  pl.BlockSpec((Lp, Lp), lambda i: (0, 0))],
        out_specs=pl.BlockSpec((B, 1), lambda i: (0, 0)),
        scratch_shapes=[pltpu.VMEM((S, B, Lp), jnp.float32)],
        compiler_params=pltpu.CompilerParams(
            dimension_semantics=("arbitrary",),
            vmem_limit_bytes=VMEM_LIMIT),
    )(x_tm, tag_w, tag_b, labels_tm, mask_tm, start, end, trans)


# ----------------------------------------------------------------------------
# Parameter init + model forward (glue in plain JAX)
# ----------------------------------------------------------------------------
def init_params(key, vocab_size, E, H, L, Lp=128):
    Hh = H // 2
    keys = jax.random.split(key, 32)

    def nrm(k, shape, scale=0.1):
        return jax.random.normal(k, shape, jnp.float32) * scale

    p = {}
    p['bert_embed'] = nrm(keys[0], (vocab_size, E)).astype(jnp.bfloat16)
    p['proj_w'] = nrm(keys[1], (E, H)).astype(jnp.bfloat16)
    p['proj_b'] = nrm(keys[2], (1, H))                       # f32 bias

    lstm = []
    idx = 3
    for _layer in range(2):                  # num_layers=2; both take 2*Hh = H features
        wih_f = nrm(keys[idx], (H, 4 * Hh)); idx += 1
        whh_f = nrm(keys[idx], (Hh, 4 * Hh)); idx += 1
        b_f = nrm(keys[idx], (1, 4 * Hh)); idx += 1          # b_ih + b_hh folded
        wih_b = nrm(keys[idx], (H, 4 * Hh)); idx += 1
        whh_b = nrm(keys[idx], (Hh, 4 * Hh)); idx += 1
        b_b = nrm(keys[idx], (1, 4 * Hh)); idx += 1
        # Block-diagonal fused recurrent weight -> one MXU push per time step.
        whh_fused = jnp.zeros((2 * Hh, 8 * Hh), jnp.float32)
        whh_fused = whh_fused.at[:Hh, :4 * Hh].set(whh_f)
        whh_fused = whh_fused.at[Hh:, 4 * Hh:].set(whh_b)
        lstm.append((wih_f.astype(jnp.bfloat16), wih_b.astype(jnp.bfloat16),
                     whh_fused.astype(jnp.bfloat16), b_f, b_b))
    p['lstm'] = lstm

    # hidden2tag, lane-padded to Lp (zero pad -> phantom-tag emissions are 0).
    p['tag_w'] = jnp.zeros((H, Lp), jnp.float32).at[:, :L].set(
        nrm(keys[idx], (H, L))).astype(jnp.bfloat16); idx += 1
    p['tag_b'] = jnp.zeros((1, Lp), jnp.float32).at[:, :L].set(
        nrm(keys[idx], (1, L))); idx += 1

    # CRF parameters (f32), phantom states get -1e30 so they never contribute.
    p['crf_start'] = jnp.full((1, Lp), NEG_INF, jnp.float32).at[:, :L].set(
        nrm(keys[idx], (1, L))); idx += 1
    p['crf_end'] = jnp.full((1, Lp), NEG_INF, jnp.float32).at[:, :L].set(
        nrm(keys[idx], (1, L))); idx += 1
    p['crf_trans'] = jnp.full((Lp, Lp), NEG_INF, jnp.float32).at[:L, :L].set(
        nrm(keys[idx], (L, L))); idx += 1

    p['label_num'] = L
    p['label_pad'] = Lp
    return p


def bert_bilstm_crf_forward(params, data, is_train=True):
    input_ids = data['bert_ids'].astype(jnp.int32)              # [B, S]
    attention_mask = data['attention_mask'].astype(jnp.int32)   # [B, S], mask[:,0]==1
    labels = data['labels'].astype(jnp.int32)                   # [B, S]

    B_real, S = input_ids.shape
    H = params['proj_w'].shape[1]
    E = params['bert_embed'].shape[1]
    L = params['label_num']
    Lp = params['label_pad']

    # Pad batch to a multiple of 8 (f32 sublane tile); padded rows get mask
    # [1, 0, ...] (torchcrf needs mask[:,0]==1) and are dropped from the mean.
    B = ((B_real + 7) // 8) * 8
    pad = B - B_real
    if pad:
        input_ids = jnp.pad(input_ids, ((0, pad), (0, 0)))
        labels = jnp.pad(labels, ((0, pad), (0, 0)))
        pad_mask = jnp.zeros((pad, S), attention_mask.dtype).at[:, 0].set(1)
        attention_mask = jnp.concatenate([attention_mask, pad_mask], axis=0)

    # TODO(synk): pretrained BERT encoder has no in-script equivalent; its
    # last_hidden_state [B, S, embedding_dim] is replaced by a deterministic
    # embedding lookup of the same shape (bf16).
    ids_tm = input_ids.T                                        # [S, B]
    emb_tm = jnp.take(params['bert_embed'], ids_tm, axis=0)     # [S, B, E] bf16

    # Time-major throughout; contiguous reshapes only (no transposes/concats).
    proj_tm = linear(emb_tm.reshape(S * B, E), params['proj_w'],
                     params['proj_b']).reshape(S, B, H)          # bf16

    x_tm = proj_tm
    for layer_params in params['lstm']:
        x_tm = bilstm_layer(x_tm, layer_params)                  # [S, B, H] bf16

    if not is_train:
        # TODO(synk): CRF Viterbi decode (inference path) not implemented.
        emissions_tm = linear(x_tm.reshape(S * B, H), params['tag_w'],
                              params['tag_b'],
                              out_dtype=jnp.float32).reshape(S, B, Lp)
        return jnp.transpose(emissions_tm[:, :B_real, :L], (1, 0, 2))

    labels_tm = labels.T[:, :, None]                             # [S, B, 1] int32
    mask_tm = attention_mask.T.astype(jnp.float32)[:, :, None]   # [S, B, 1] f32
    llh = tag_crf_llh(x_tm, params['tag_w'], params['tag_b'],
                      labels_tm, mask_tm,
                      params['crf_start'], params['crf_end'],
                      params['crf_trans'])                        # [B, 1]
    return -jnp.mean(llh[:B_real, 0])                            # reduction='mean'


if __name__ == "__main__":
    B, S = 2, 8
    vocab_size = 100
    E, H, L = 768, 256, 5          # module defaults: embedding_dim=768, hidden_dim=256

    key = jax.random.PRNGKey(0)
    pkey, k1, k2 = jax.random.split(key, 3)
    params = init_params(pkey, vocab_size, E, H, L)

    input_ids = jax.random.randint(k1, (B, S), 0, vocab_size, dtype=jnp.int32)
    labels = jax.random.randint(k2, (B, S), 0, L, dtype=jnp.int32)
    attention_mask = jnp.array([[1, 1, 1, 1, 1, 1, 1, 1],
                                [1, 1, 1, 1, 1, 0, 0, 0]], dtype=jnp.int32)

    data = {'bert_ids': input_ids, 'attention_mask': attention_mask,
            'labels': labels}

    loss = bert_bilstm_crf_forward(params, data, is_train=True)
    loss = jax.block_until_ready(loss)
    assert bool(jnp.isfinite(loss))
    print("KERNEL_OK")
</pallas_src>

<mosaic_0001>
module attributes {stable_mosaic.version = 11 : i64} {
  func.func @_linear_kernel(%arg0: i32, %arg1: memref<32x768xbf16, #tpu.memory_space<vmem>>, %arg2: memref<768x256xbf16, #tpu.memory_space<vmem>>, %arg3: memref<1x256xf32, #tpu.memory_space<vmem>>, %arg4: memref<32x256xbf16, #tpu.memory_space<vmem>>) attributes {dimension_semantics = [#tpu.dimension_semantics<parallel>], iteration_bounds = array<i64: 2>, scalar_prefetch = 0 : i64, scratch_operands = 0 : i64, tpu.core_type = #tpu.core_type<tc>, window_params = [{transform_indices = @transform_0, window_bounds = array<i64: 32, 768>}, {pipeline_mode = #tpu.pipeline_mode<synchronous>, transform_indices = @transform_1, window_bounds = array<i64: 768, 256>}, {pipeline_mode = #tpu.pipeline_mode<synchronous>, transform_indices = @transform_2, window_bounds = array<i64: 1, 256>}, {transform_indices = @transform_3, window_bounds = array<i64: 32, 256>}]} {
    %c0 = arith.constant 0 : index
    %c0_0 = arith.constant 0 : index
    %0 = vector.load %arg1[%c0, %c0_0] : memref<32x768xbf16, #tpu.memory_space<vmem>>, vector<32x768xbf16>
    %c0_1 = arith.constant 0 : index
    %c0_2 = arith.constant 0 : index
    %1 = vector.load %arg2[%c0_1, %c0_2] : memref<768x256xbf16, #tpu.memory_space<vmem>>, vector<768x256xbf16>
    %cst = arith.constant dense<0.000000e+00> : vector<32x256xf32>
    %2 = tpu.matmul %0, %1, %cst {dimension_numbers = #tpu.dot_dimension_numbers<[1], [0], [0], [1], [0, 0, 1, 1], [], []>} : vector<32x768xbf16>, vector<768x256xbf16>, vector<32x256xf32> -> vector<32x256xf32>
    %c0_3 = arith.constant 0 : index
    %c0_4 = arith.constant 0 : index
    %3 = vector.load %arg3[%c0_3, %c0_4] : memref<1x256xf32, #tpu.memory_space<vmem>>, vector<1x256xf32>
    %4 = vector.broadcast %3 : vector<1x256xf32> to vector<32x256xf32>
    %5 = arith.addf %2, %4 : vector<32x256xf32>
    %6 = arith.truncf %5 : vector<32x256xf32> to vector<32x256xbf16>
    %c0_5 = arith.constant 0 : index
    %c0_6 = arith.constant 0 : index
    %7 = vector.load %arg4[%c0_5, %c0_6] : memref<32x256xbf16, #tpu.memory_space<vmem>>, vector<32x256xbf16>
    tpu.vector_store %arg4[%c0_5, %c0_6], %6 {strides = array<i32>} : memref<32x256xbf16, #tpu.memory_space<vmem>>, vector<32x256xbf16>,
    return
  }
  func.func @transform_0(%arg0: i32) -> (i32, i32) {
    %c0_i32 = arith.constant 0 : i32
    %c0_i32_0 = arith.constant 0 : i32
    return %arg0, %c0_i32 : i32, i32
  }
  func.func @transform_1(%arg0: i32) -> (i32, i32) {
    %c0_i32 = arith.constant 0 : i32
    %c0_i32_0 = arith.constant 0 : i32
    %c0_i32_1 = arith.constant 0 : i32
    return %c0_i32, %c0_i32_0 : i32, i32
  }
  func.func @transform_2(%arg0: i32) -> (i32, i32) {
    %c0_i32 = arith.constant 0 : i32
    %c0_i32_0 = arith.constant 0 : i32
    %c0_i32_1 = arith.constant 0 : i32
    return %c0_i32, %c0_i32_0 : i32, i32
  }
  func.func @transform_3(%arg0: i32) -> (i32, i32) {
    %c0_i32 = arith.constant 0 : i32
    %c0_i32_0 = arith.constant 0 : i32
    return %arg0, %c0_i32 : i32, i32
  }
}

</mosaic_0001>

<llo_original>
// kernel: tpu_custom_call.1
$region0: #{tpu_custom_call.1}
  #allocation0 [shape = 'u32[]', space=smem, size = 0x4, offset = 0x4, fixed_abs, tag = 'smem constant byte address 0x4 - core index']
  #allocation1 [shape = 'u32[144,128]{1,0:T(1,128)}', space=vmem, size = 0x12000, scoped, tag = 'internal scratch']
  %s0 = inlined_call_operand.hbm [shape: bf16[64,768], index: 0, kind: input, shape index: {}]
  %s1 = inlined_call_operand.hbm [shape: bf16[768,256], index: 1, kind: input, shape index: {}]
  %s2 = inlined_call_operand.vmem [shape: f32[1,256], index: 2, kind: input, shape index: {}]
  %s3 = inlined_call_operand.hbm [shape: bf16[64,256], index: 3, kind: output, shape index: {}]
  %s4 = sld [smem:[#allocation0]]
  $region53: #{tpu_custom_call.1} parent=0
    _
  %s6 = ssub.s32 1, %s4
  %s7 = scalar_select 0, %s6, %s4
  $region1: #{tpu_custom_call.1} parent=0
    #allocation2 [shape = 'u8[98304]{0}', space=vmem, size = 0x18000, scoped, tag = 'input window, operand 0']
    #allocation3 [shape = 's32[2]{0}', space=sflag, size = 0x8, scoped, tag = 'scoped memory for tpu_custom_call.1']
    #allocation4 [shape = 's32[2]{0}', space=sflag, size = 0x8, scoped, tag = 'scoped memory for tpu_custom_call.1']
    #allocation5 [shape = 'u8[393216]{0}', space=vmem, size = 0x60000, scoped, tag = 'input window, operand 1, single buffered']
    #allocation6 [shape = 's32[1]{0}', space=sflag, size = 0x4, scoped, tag = 'scoped memory for tpu_custom_call.1']
    #allocation7 [shape = 'u8[32768]{0}', space=vmem, size = 0x8000, scoped, tag = 'output window, operand 0']
    %8 = vsyncpa [#allocation3], 0
    %s9 = scalar_lea.sflag [#allocation3], 1
    %10 = vsyncpa %s9, 0
    %11 = vsyncpa [#allocation6], 0
    %12 = vsyncpa [#allocation4], 0
    %s13 = scalar_lea.sflag [#allocation4], 1
    %14 = vsyncpa %s13, 0
    loop: start=0, step=1, limit=4
    $region2: #{tpu_custom_call.1} parent=1 // loop_pre_header
      _
    $region3: #{tpu_custom_call.1} parent=1 // loop_header
      %s16 = sphi 0, %s20
      %p17 = scmp.ge.s32.totalorder %s16, 4
      %s26 = sphi 0, %s28
      %s29 = sphi 0, %s26
      %s30 = sphi 0, %s29
      %s46 = sphi 0, %s30
      %s50 = sphi 0, %s50
      %s52 = sphi 0, %s50
      %s53 = sphi 0, %s52
      %s67 = sphi 0, %s53
      %s71 = sphi 0, %s71
      %s73 = sphi 0, %s71
      %s74 = sphi 0, %s73
      %s88 = sphi 0, %s74
      %s94 = sphi 0, %s96
      %s97 = sphi 0, %s94
      %s98 = sphi 0, %s97
      %s114 = sphi 0, %s98
    $region4: #{tpu_custom_call.1} parent=1 // loop_header_branch
      %19 = sbr.rel (%p17) target = $region8
    $region5: #{tpu_custom_call.1} parent=1 // loop_body
      %s21 = ssub.s32 %s16, 1
      %s22 = ssub.s32 %s16, 2
      %s23 = sadd.s32 %s16, 1
      %s24 = ssub.s32 %s16, %s23
      %p25 = scmp.eq.s32.totalorder %s24, 0
      %s27 = sadd.s32 %s26, 1
      %s28 = scalar_select %p25, %s26, %s27
      %p31 = pneg %p25
      %p32 = scmp.eq.s32.totalorder %s16, 1
      %p33 = por %p31, %p32
      %p34 = scmp.ne.s32.totalorder %s26, %s29
      %p35 = scmp.eq.s32.totalorder %s16, 0
      %p36 = por %p34, %p35
      %p37 = scmp.ne.s32.totalorder %s26, %s29
      %p38 = scmp.eq.s32.totalorder %s21, 1
      %p39 = por %p37, %p38
      %p40 = scmp.ne.s32.totalorder %s29, %s30
      %p41 = scmp.eq.s32.totalorder %s21, 0
      %p42 = por %p40, %p41
      %p43 = scmp.ne.s32.totalorder %s29, %s30
      %p44 = scmp.eq.s32.totalorder %s22, 1
      %p45 = por %p43, %p44
      %p47 = scmp.ne.s32.totalorder %s30, %s46
      %p48 = scmp.eq.s32.totalorder %s22, 0
      %p49 = por %p47, %p48
      %s51 = sadd.s32 %s50, 1
      %p54 = scmp.eq.s32.totalorder %s16, 1
      %p55 = scmp.ne.s32.totalorder %s50, %s52
      %p56 = scmp.eq.s32.totalorder %s16, 0
      %p57 = por %p55, %p56
      %p58 = scmp.ne.s32.totalorder %s50, %s52
      %p59 = scmp.eq.s32.totalorder %s21, 1
      %p60 = por %p58, %p59
      %p61 = scmp.ne.s32.totalorder %s52, %s53
      %p62 = scmp.eq.s32.totalorder %s21, 0
      %p63 = por %p61, %p62
      %p64 = scmp.ne.s32.totalorder %s52, %s53
      %p65 = scmp.eq.s32.totalorder %s22, 1
      %p66 = por %p64, %p65
      %p68 = scmp.ne.s32.totalorder %s53, %s67
      %p69 = scmp.eq.s32.totalorder %s22, 0
      %p70 = por %p68, %p69
      %s72 = sadd.s32 %s71, 1
      %p75 = scmp.eq.s32.totalorder %s16, 1
      %p76 = scmp.ne.s32.totalorder %s71, %s73
      %p77 = scmp.eq.s32.totalorder %s16, 0
      %p78 = por %p76, %p77
      %p79 = scmp.ne.s32.totalorder %s71, %s73
      %p80 = scmp.eq.s32.totalorder %s21, 1
      %p81 = por %p79, %p80
      %p82 = scmp.ne.s32.totalorder %s73, %s74
      %p83 = scmp.eq.s32.totalorder %s21, 0
      %p84 = por %p82, %p83
      %p85 = scmp.ne.s32.totalorder %s73, %s74
      %p86 = scmp.eq.s32.totalorder %s22, 1
      %p87 = por %p85, %p86
      %p89 = scmp.ne.s32.totalorder %s74, %s88
      %p90 = scmp.eq.s32.totalorder %s22, 0
      %p91 = por %p89, %p90
      %s92 = ssub.s32 %s16, %s23
      %p93 = scmp.eq.s32.totalorder %s92, 0
      %s95 = sadd.s32 %s94, 1
      %s96 = scalar_select %p93, %s94, %s95
      %p99 = pneg %p93
      %p100 = scmp.eq.s32.totalorder %s16, 1
      %p101 = por %p99, %p100
      %p102 = scmp.ne.s32.totalorder %s94, %s97
      %p103 = scmp.eq.s32.totalorder %s16, 0
      %p104 = por %p102, %p103
      %p105 = scmp.ne.s32.totalorder %s94, %s97
      %p106 = scmp.eq.s32.totalorder %s21, 1
      %p107 = por %p105, %p106
      %p108 = scmp.ne.s32.totalorder %s97, %s98
      %p109 = scmp.eq.s32.totalorder %s21, 0
      %p110 = por %p108, %p109
      %p111 = scmp.ne.s32.totalorder %s97, %s98
      %p112 = scmp.eq.s32.totalorder %s22, 1
      %p113 = por %p111, %p112
      %p115 = scmp.ne.s32.totalorder %s98, %s114
      %p116 = scmp.eq.s32.totalorder %s22, 0
      %p117 = por %p115, %p116
      %p118 = scmp.le.s32.totalorder 1, %s16
      %p119 = scmp.lt.s32.totalorder %s16, 3
      %p120 = pnand %p118, %p119
      %p121 = pneg %p120
      // Predicated region
      $region9: #{tpu_custom_call.1} parent=5 // pred_check
        _
      $region10: #{tpu_custom_call.1} parent=5 // pred_check_branch
        %123 = sbr.rel (%p120) target = $region12
      $region11: #{tpu_custom_call.1} parent=5 // pred_region
        %s124 = ssub.s32 %s16, 1
        // Predicated region
        $region13: #{tpu_custom_call.1} parent=11 // pred_check
          %p125 = pneg %p63
        $region14: #{tpu_custom_call.1} parent=11 // pred_check_branch
          %127 = sbr.rel (%p125) target = $region16
        $region15: #{tpu_custom_call.1} parent=11 // pred_region
          %s129 = ssub.s32 12288, 12288
          %130 = vsyncadd [#allocation6], %s129
          %s131 = sshll.u32 [#allocation5], 4
          %s132 = int_to_ptr.vmem [resolvable:$true] %s131
          %137 = dma.hbm_to_vmem [thread:$0]  %s1, 12288, %s132, [#allocation6], 128, 128, 8
        $region16: #{tpu_custom_call.1} parent=11 // pred_fallthru
          _
        // Predicated region
        $region17: #{tpu_custom_call.1} parent=11 // pred_check
          %p138 = pneg %p84
        $region18: #{tpu_custom_call.1} parent=11 // pred_check_branch
          %140 = sbr.rel (%p138) target = $region20
        $region19: #{tpu_custom_call.1} parent=11 // pred_region
          _
        $region20: #{tpu_custom_call.1} parent=11 // pred_fallthru
          _
      $region12: #{tpu_custom_call.1} parent=5 // pred_fallthru
        _
      %p141 = scmp.lt.s32.totalorder %s16, 2
      // Predicated region
      $region21: #{tpu_custom_call.1} parent=5 // pred_check
        %p142 = pneg %p141
      $region22: #{tpu_custom_call.1} parent=5 // pred_check_branch
        %144 = sbr.rel (%p142) target = $region24
      $region23: #{tpu_custom_call.1} parent=5 // pred_region
        // Predicated region
        $region25: #{tpu_custom_call.1} parent=23 // pred_check
          %p145 = pneg %p36
        $region26: #{tpu_custom_call.1} parent=23 // pred_check_branch
          %147 = sbr.rel (%p145) target = $region28
        $region27: #{tpu_custom_call.1} parent=23 // pred_region
          %s148 = sand.u32 %s26, 1
          %s149 = scalar_lea.sflag [#allocation3], %s148
          %s150 = sand.u32 %s26, 1
          %s151 = smul.addr %s150, 96
          %s152 = scalar_lea.vmem [#allocation2], %s151
          %s153 = smul.u32 4, %s16
          %s155 = ssub.s32 1536, 1536
          %156 = vsyncadd %s149, %s155
          %s157 = smul.addr %s153, 6
          %s158 = smul.addr %s157, 64
          %s159 = scalar_lea.hbm %s0, %s158
          %s160 = sshll.u32 %s152, 4
          %s161 = int_to_ptr.vmem [resolvable:$true] %s160
          %166 = dma.hbm_to_vmem [thread:$0]  %s159, 1536, %s161, %s149, 384, 384, 24
        $region28: #{tpu_custom_call.1} parent=23 // pred_fallthru
          _
      $region24: #{tpu_custom_call.1} parent=5 // pred_fallthru
        _
      %p167 = scmp.le.s32.totalorder 1, %s16
      %p168 = scmp.lt.s32.totalorder %s16, 3
      %p169 = pnand %p167, %p168
      %p170 = pneg %p169
      // Predicated region
      $region29: #{tpu_custom_call.1} parent=5 // pred_check
        _
      $region30: #{tpu_custom_call.1} parent=5 // pred_check_branch
        %172 = sbr.rel (%p169) target = $region32
      $region31: #{tpu_custom_call.1} parent=5 // pred_region
        %s173 = ssub.s32 %s16, 1
        %s174 = sand.u32 %s29, 1
        %s175 = scalar_lea.sflag [#allocation3], %s174
        %s176 = sand.u32 %s29, 1
        %s177 = smul.addr %s176, 96
        %s178 = scalar_lea.vmem [#allocation2], %s177
        // Predicated region
        $region33: #{tpu_custom_call.1} parent=31 // pred_check
          %p179 = pneg %p42
        $region34: #{tpu_custom_call.1} parent=31 // pred_check_branch
          %181 = sbr.rel (%p179) target = $region36
        $region35: #{tpu_custom_call.1} parent=31 // pred_region
          %182 = dma.done %s175, 1536
        $region36: #{tpu_custom_call.1} parent=31 // pred_fallthru
          _
        // Predicated region
        $region37: #{tpu_custom_call.1} parent=31 // pred_check
          %p183 = pneg %p63
        $region38: #{tpu_custom_call.1} parent=31 // pred_check_branch
          %185 = sbr.rel (%p183) target = $region40
        $region39: #{tpu_custom_call.1} parent=31 // pred_region
          %186 = dma.done [#allocation6], 12288
        $region40: #{tpu_custom_call.1} parent=31 // pred_fallthru
          _
        %s187 = sand.u32 %s29, 1
        %s188 = scalar_lea.sflag [#allocation3], %s187
        %s189 = sand.u32 %s29, 1
        %s190 = smul.addr %s189, 96
        %s191 = scalar_lea.vmem [#allocation2], %s190
        %p192 = pneg %p42
        %p193 = pneg %p39
        %p194 = pneg %p63
        %p195 = pneg %p60
        %p196 = pneg %p84
        %p197 = pneg %p81
        %p198 = pneg %p110
        %p199 = pneg %p107
        %s200 = sand.u32 %s97, 1
        %s201 = scalar_lea.sflag [#allocation4], %s200
        %s202 = sand.u32 %s97, 1
        %s203 = smul.addr %s202, 32
        %s204 = scalar_lea.vmem [#allocation7], %s203
        %s205 = smul.u32 4, %s21
        %s206 = smul.u32 4, %s21
        %v207 = vld [vmem:[%s178] sm:$0xff]
        %v208 = vld [vmem:[%s178 + $0x8] sm:$0xff]
        %v209 = vld [vmem:[%s178 + $0x10] sm:$0xff]
        %v210 = vld [vmem:[%s178 + $0x18] sm:$0xff]
        %v211 = vld [vmem:[%s178 + $0x20] sm:$0xff]
        %v212 = vld [vmem:[%s178 + $0x28] sm:$0xff]
        %v213 = vld [vmem:[%s178 + $0x30] sm:$0xff]
        %v214 = vld [vmem:[%s178 + $0x38] sm:$0xff]
        %v215 = vld [vmem:[%s178 + $0x40] sm:$0xff]
        %v216 = vld [vmem:[%s178 + $0x48] sm:$0xff]
        %v217 = vld [vmem:[%s178 + $0x50] sm:$0xff]
        %v218 = vld [vmem:[%s178 + $0x58] sm:$0xff]
        %v219 = vld [vmem:[#allocation5] sm:$0xff]
        %v220 = vld [vmem:[#allocation5 + $0x8] sm:$0xff]
        %v221 = vld [vmem:[#allocation5 + $0x10] sm:$0xff]
        %v222 = vld [vmem:[#allocation5 + $0x18] sm:$0xff]
        %v223 = vld [vmem:[#allocation5 + $0x20] sm:$0xff]
        %v224 = vld [vmem:[#allocation5 + $0x28] sm:$0xff]
        %v225 = vld [vmem:[#allocation5 + $0x30] sm:$0xff]
        %v226 = vld [vmem:[#allocation5 + $0x38] sm:$0xff]
        %v227 = vld [vmem:[#allocation5 + $0x40] sm:$0xff]
        %v228 = vld [vmem:[#allocation5 + $0x48] sm:$0xff]
        %v229 = vld [vmem:[#allocation5 + $0x50] sm:$0xff]
        %v230 = vld [vmem:[#allocation5 + $0x58] sm:$0xff]
        %v231 = vld [vmem:[#allocation5 + $0x60] sm:$0xff]
        %v232 = vld [vmem:[#allocation5 + $0x68] sm:$0xff]
        %v233 = vld [vmem:[#allocation5 + $0x70] sm:$0xff]
        %v234 = vld [vmem:[#allocation5 + $0x78] sm:$0xff]
        %v235 = vld [vmem:[#allocation5 + $0x80] sm:$0xff]
        %v236 = vld [vmem:[#allocation5 + $0x88] sm:$0xff]
        %v237 = vld [vmem:[#allocation5 + $0x90] sm:$0xff]
        %v238 = vld [vmem:[#allocation5 + $0x98] sm:$0xff]
        %v239 = vld [vmem:[#allocation5 + $0xa0] sm:$0xff]
        %v240 = vld [vmem:[#allocation5 + $0xa8] sm:$0xff]
        %v241 = vld [vmem:[#allocation5 + $0xb0] sm:$0xff]
        %v242 = vld [vmem:[#allocation5 + $0xb8] sm:$0xff]
        %v243 = vld [vmem:[#allocation5 + $0xc0] sm:$0xff]
        %v244 = vld [vmem:[#allocation5 + $0xc8] sm:$0xff]
        %v245 = vld [vmem:[#allocation5 + $0xd0] sm:$0xff]
        %v246 = vld [vmem:[#allocation5 + $0xd8] sm:$0xff]
        %v247 = vld [vmem:[#allocation5 + $0xe0] sm:$0xff]
        %v248 = vld [vmem:[#allocation5 + $0xe8] sm:$0xff]
        %v249 = vld [vmem:[#allocation5 + $0xf0] sm:$0xff]
        %v250 = vld [vmem:[#allocation5 + $0xf8] sm:$0xff]
        %v251 = vld [vmem:[#allocation5 + $0x100] sm:$0xff]
        %v252 = vld [vmem:[#allocation5 + $0x108] sm:$0xff]
        %v253 = vld [vmem:[#allocation5 + $0x110] sm:$0xff]
        %v254 = vld [vmem:[#allocation5 + $0x118] sm:$0xff]
        %v255 = vld [vmem:[#allocation5 + $0x120] sm:$0xff]
        %v256 = vld [vmem:[#allocation5 + $0x128] sm:$0xff]
        %v257 = vld [vmem:[#allocation5 + $0x130] sm:$0xff]
        %v258 = vld [vmem:[#allocation5 + $0x138] sm:$0xff]
        %v259 = vld [vmem:[#allocation5 + $0x140] sm:$0xff]
        %v260 = vld [vmem:[#allocation5 + $0x148] sm:$0xff]
        %v261 = vld [vmem:[#allocation5 + $0x150] sm:$0xff]
        %v262 = vld [vmem:[#allocation5 + $0x158] sm:$0xff]
        %v263 = vld [vmem:[#allocation5 + $0x160] sm:$0xff]
        %v264 = vld [vmem:[#allocation5 + $0x168] sm:$0xff]
        %v265 = vld [vmem:[#allocation5 + $0x170] sm:$0xff]
        %v266 = vld [vmem:[#allocation5 + $0x178] sm:$0xff]
        %v267 = vld [vmem:[#allocation5 + $0x180] sm:$0xff]
        %v268 = vld [vmem:[#allocation5 + $0x188] sm:$0xff]
        %v269 = vld [vmem:[#allocation5 + $0x190] sm:$0xff]
        %v270 = vld [vmem:[#allocation5 + $0x198] sm:$0xff]
        %v271 = vld [vmem:[#allocation5 + $0x1a0] sm:$0xff]
        %v272 = vld [vmem:[#allocation5 + $0x1a8] sm:$0xff]
        %v273 = vld [vmem:[#allocation5 + $0x1b0] sm:$0xff]
        %v274 = vld [vmem:[#allocation5 + $0x1b8] sm:$0xff]
        %v275 = vld [vmem:[#allocation5 + $0x1c0] sm:$0xff]
        %v276 = vld [vmem:[#allocation5 + $0x1c8] sm:$0xff]
        %v277 = vld [vmem:[#allocation5 + $0x1d0] sm:$0xff]
        %v278 = vld [vmem:[#allocation5 + $0x1d8] sm:$0xff]
        %v279 = vld [vmem:[#allocation5 + $0x1e0] sm:$0xff]
        %v280 = vld [vmem:[#allocation5 + $0x1e8] sm:$0xff]
        %v281 = vld [vmem:[#allocation5 + $0x1f0] sm:$0xff]
        %v282 = vld [vmem:[#allocation5 + $0x1f8] sm:$0xff]
        %v283 = vld [vmem:[#allocation5 + $0x200] sm:$0xff]
        %v284 = vld [vmem:[#allocation5 + $0x208] sm:$0xff]
        %v285 = vld [vmem:[#allocation5 + $0x210] sm:$0xff]
        %v286 = vld [vmem:[#allocation5 + $0x218] sm:$0xff]
        %v287 = vld [vmem:[#allocation5 + $0x220] sm:$0xff]
        %v288 = vld [vmem:[#allocation5 + $0x228] sm:$0xff]
        %v289 = vld [vmem:[#allocation5 + $0x230] sm:$0xff]
        %v290 = vld [vmem:[#allocation5 + $0x238] sm:$0xff]
        %v291 = vld [vmem:[#allocation5 + $0x240] sm:$0xff]
        %v292 = vld [vmem:[#allocation5 + $0x248] sm:$0xff]
        %v293 = vld [vmem:[#allocation5 + $0x250] sm:$0xff]
        %v294 = vld [vmem:[#allocation5 + $0x258] sm:$0xff]
        %v295 = vld [vmem:[#allocation5 + $0x260] sm:$0xff]
        %v296 = vld [vmem:[#allocation5 + $0x268] sm:$0xff]
        %v297 = vld [vmem:[#allocation5 + $0x270] sm:$0xff]
        %v298 = vld [vmem:[#allocation5 + $0x278] sm:$0xff]
        %v299 = vld [vmem:[#allocation5 + $0x280] sm:$0xff]
        %v300 = vld [vmem:[#allocation5 + $0x288] sm:$0xff]
        %v301 = vld [vmem:[#allocation5 + $0x290] sm:$0xff]
        %v302 = vld [vmem:[#allocation5 + $0x298] sm:$0xff]
        %v303 = vld [vmem:[#allocation5 + $0x2a0] sm:$0xff]
        %v304 = vld [vmem:[#allocation5 + $0x2a8] sm:$0xff]
        %v305 = vld [vmem:[#allocation5 + $0x2b0] sm:$0xff]
        %v306 = vld [vmem:[#allocation5 + $0x2b8] sm:$0xff]
        %v307 = vld [vmem:[#allocation5 + $0x2c0] sm:$0xff]
        %v308 = vld [vmem:[#allocation5 + $0x2c8] sm:$0xff]
        %v309 = vld [vmem:[#allocation5 + $0x2d0] sm:$0xff]
        %v310 = vld [vmem:[#allocation5 + $0x2d8] sm:$0xff]
        %v311 = vld [vmem:[#allocation5 + $0x2e0] sm:$0xff]
        %v312 = vld [vmem:[#allocation5 + $0x2e8] sm:$0xff]
        %v313 = vld [vmem:[#allocation5 + $0x2f0] sm:$0xff]
        %v314 = vld [vmem:[#allocation5 + $0x2f8] sm:$0xff]
        %v315 = vld [vmem:[%s2] sm:$0x3]
        %v317 = vlaneseq
        %v318 = vshrl.u32 %v317, 7
        %v319 = vsub.s32 0, %v318
        %v320 = vrot.slane %v315, %v319
        %v321 = vlaneseq
        %v322 = vshrl.u32 %v321, 7
        %v323 = vsub.s32 1, %v322
        %v324 = vrot.slane %v315, %v323
        %v339 = vunpack.c.l.b16 %v207
        %v340 = vunpack.c.h.b16 %v207
        %v341 = vunpack.c.l.b16 %v208
        %v342 = vunpack.c.h.b16 %v208
        %v343 = vunpack.c.l.b16 %v209
        %v344 = vunpack.c.h.b16 %v209
        %v345 = vunpack.c.l.b16 %v210
        %v346 = vunpack.c.h.b16 %v210
        %v347 = vunpack.c.l.b16 %v211
        %v348 = vunpack.c.h.b16 %v211
        %v349 = vunpack.c.l.b16 %v212
        %v350 = vunpack.c.h.b16 %v212
        %v351 = vunpack.c.l.b16 %v213
        %v352 = vunpack.c.h.b16 %v213
        %v353 = vunpack.c.l.b16 %v214
        %v354 = vunpack.c.h.b16 %v214
        %v355 = vunpack.c.l.b16 %v215
        %v356 = vunpack.c.h.b16 %v215
        %v357 = vunpack.c.l.b16 %v216
        %v358 = vunpack.c.h.b16 %v216
        %v359 = vunpack.c.l.b16 %v217
        %v360 = vunpack.c.h.b16 %v217
        %v361 = vunpack.c.l.b16 %v218
        %v362 = vunpack.c.h.b16 %v218
        %v363 = vpack.c.b16 %v345, %v339
        %v364 = vpack.c.b16 %v346, %v340
        %v365 = vpack.c.b16 %v347, %v341
        %v366 = vpack.c.b16 %v348, %v342
        %v367 = vpack.c.b16 %v349, %v343
        %v368 = vpack.c.b16 %v350, %v344
        %v369 = vpack.c.b16 %v357, %v351
        %v370 = vpack.c.b16 %v358, %v352
        %v371 = vpack.c.b16 %v359, %v353
        %v372 = vpack.c.b16 %v360, %v354
        %v373 = vpack.c.b16 %v361, %v355
        %v374 = vpack.c.b16 %v362, %v356
        %v483 = vunpack.c.l.b16 %v219
        %v484 = vunpack.c.h.b16 %v219
        %v485 = vunpack.c.l.b16 %v220
        %v486 = vunpack.c.h.b16 %v220
        %v487 = vunpack.c.l.b16 %v221
        %v488 = vunpack.c.h.b16 %v221
        %v489 = vunpack.c.l.b16 %v222
        %v490 = vunpack.c.h.b16 %v222
        %v491 = vunpack.c.l.b16 %v223
        %v492 = vunpack.c.h.b16 %v223
        %v493 = vunpack.c.l.b16 %v224
        %v494 = vunpack.c.h.b16 %v224
        %v495 = vunpack.c.l.b16 %v225
        %v496 = vunpack.c.h.b16 %v225
        %v497 = vunpack.c.l.b16 %v226
        %v498 = vunpack.c.h.b16 %v226
        %v499 = vunpack.c.l.b16 %v227
        %v500 = vunpack.c.h.b16 %v227
        %v501 = vunpack.c.l.b16 %v228
        %v502 = vunpack.c.h.b16 %v228
        %v503 = vunpack.c.l.b16 %v229
        %v504 = vunpack.c.h.b16 %v229
        %v505 = vunpack.c.l.b16 %v230
        %v506 = vunpack.c.h.b16 %v230
        %v507 = vunpack.c.l.b16 %v231
        %v508 = vunpack.c.h.b16 %v231
        %v509 = vunpack.c.l.b16 %v232
        %v510 = vunpack.c.h.b16 %v232
        %v511 = vunpack.c.l.b16 %v233
        %v512 = vunpack.c.h.b16 %v233
        %v513 = vunpack.c.l.b16 %v234
        %v514 = vunpack.c.h.b16 %v234
        %v515 = vunpack.c.l.b16 %v235
        %v516 = vunpack.c.h.b16 %v235
        %v517 = vunpack.c.l.b16 %v236
        %v518 = vunpack.c.h.b16 %v236
        %v519 = vunpack.c.l.b16 %v237
        %v520 = vunpack.c.h.b16 %v237
        %v521 = vunpack.c.l.b16 %v238
        %v522 = vunpack.c.h.b16 %v238
        %v523 = vunpack.c.l.b16 %v239
        %v524 = vunpack.c.h.b16 %v239
        %v525 = vunpack.c.l.b16 %v240
        %v526 = vunpack.c.h.b16 %v240
        %v527 = vunpack.c.l.b16 %v241
        %v528 = vunpack.c.h.b16 %v241
        %v529 = vunpack.c.l.b16 %v242
        %v530 = vunpack.c.h.b16 %v242
        %v531 = vunpack.c.l.b16 %v243
        %v532 = vunpack.c.h.b16 %v243
        %v533 = vunpack.c.l.b16 %v244
        %v534 = vunpack.c.h.b16 %v244
        %v535 = vunpack.c.l.b16 %v245
        %v536 = vunpack.c.h.b16 %v245
        %v537 = vunpack.c.l.b16 %v246
        %v538 = vunpack.c.h.b16 %v246
        %v539 = vunpack.c.l.b16 %v247
        %v540 = vunpack.c.h.b16 %v247
        %v541 = vunpack.c.l.b16 %v248
        %v542 = vunpack.c.h.b16 %v248
        %v543 = vunpack.c.l.b16 %v249
        %v544 = vunpack.c.h.b16 %v249
        %v545 = vunpack.c.l.b16 %v250
        %v546 = vunpack.c.h.b16 %v250
        %v547 = vunpack.c.l.b16 %v251
        %v548 = vunpack.c.h.b16 %v251
        %v549 = vunpack.c.l.b16 %v252
        %v550 = vunpack.c.h.b16 %v252
        %v551 = vunpack.c.l.b16 %v253
        %v552 = vunpack.c.h.b16 %v253
        %v553 = vunpack.c.l.b16 %v254
        %v554 = vunpack.c.h.b16 %v254
        %v555 = vunpack.c.l.b16 %v255
        %v556 = vunpack.c.h.b16 %v255
        %v557 = vunpack.c.l.b16 %v256
        %v558 = vunpack.c.h.b16 %v256
        %v559 = vunpack.c.l.b16 %v257
        %v560 = vunpack.c.h.b16 %v257
        %v561 = vunpack.c.l.b16 %v258
        %v562 = vunpack.c.h.b16 %v258
        %v563 = vunpack.c.l.b16 %v259
        %v564 = vunpack.c.h.b16 %v259
        %v565 = vunpack.c.l.b16 %v260
        %v566 = vunpack.c.h.b16 %v260
        %v567 = vunpack.c.l.b16 %v261
        %v568 = vunpack.c.h.b16 %v261
        %v569 = vunpack.c.l.b16 %v262
        %v570 = vunpack.c.h.b16 %v262
        %v571 = vunpack.c.l.b16 %v263
        %v572 = vunpack.c.h.b16 %v263
        %v573 = vunpack.c.l.b16 %v264
        %v574 = vunpack.c.h.b16 %v264
        %v575 = vunpack.c.l.b16 %v265
        %v576 = vunpack.c.h.b16 %v265
        %v577 = vunpack.c.l.b16 %v266
        %v578 = vunpack.c.h.b16 %v266
        %v579 = vunpack.c.l.b16 %v267
        %v580 = vunpack.c.h.b16 %v267
        %v581 = vunpack.c.l.b16 %v268
        %v582 = vunpack.c.h.b16 %v268
        %v583 = vunpack.c.l.b16 %v269
        %v584 = vunpack.c.h.b16 %v269
        %v585 = vunpack.c.l.b16 %v270
        %v586 = vunpack.c.h.b16 %v270
        %v587 = vunpack.c.l.b16 %v271
        %v588 = vunpack.c.h.b16 %v271
        %v589 = vunpack.c.l.b16 %v272
        %v590 = vunpack.c.h.b16 %v272
        %v591 = vunpack.c.l.b16 %v273
        %v592 = vunpack.c.h.b16 %v273
        %v593 = vunpack.c.l.b16 %v274
        %v594 = vunpack.c.h.b16 %v274
        %v595 = vunpack.c.l.b16 %v275
        %v596 = vunpack.c.h.b16 %v275
        %v597 = vunpack.c.l.b16 %v276
        %v598 = vunpack.c.h.b16 %v276
        %v599 = vunpack.c.l.b16 %v277
        %v600 = vunpack.c.h.b16 %v277
        %v601 = vunpack.c.l.b16 %v278
        %v602 = vunpack.c.h.b16 %v278
        %v603 = vunpack.c.l.b16 %v279
        %v604 = vunpack.c.h.b16 %v279
        %v605 = vunpack.c.l.b16 %v280
        %v606 = vunpack.c.h.b16 %v280
        %v607 = vunpack.c.l.b16 %v281
        %v608 = vunpack.c.h.b16 %v281
        %v609 = vunpack.c.l.b16 %v282
        %v610 = vunpack.c.h.b16 %v282
        %v611 = vunpack.c.l.b16 %v283
        %v612 = vunpack.c.h.b16 %v283
        %v613 = vunpack.c.l.b16 %v284
        %v614 = vunpack.c.h.b16 %v284
        %v615 = vunpack.c.l.b16 %v285
        %v616 = vunpack.c.h.b16 %v285
        %v617 = vunpack.c.l.b16 %v286
        %v618 = vunpack.c.h.b16 %v286
        %v619 = vunpack.c.l.b16 %v287
        %v620 = vunpack.c.h.b16 %v287
        %v621 = vunpack.c.l.b16 %v288
        %v622 = vunpack.c.h.b16 %v288
        %v623 = vunpack.c.l.b16 %v289
        %v624 = vunpack.c.h.b16 %v289
        %v625 = vunpack.c.l.b16 %v290
        %v626 = vunpack.c.h.b16 %v290
        %v627 = vunpack.c.l.b16 %v291
        %v628 = vunpack.c.h.b16 %v291
        %v629 = vunpack.c.l.b16 %v292
        %v630 = vunpack.c.h.b16 %v292
        %v631 = vunpack.c.l.b16 %v293
        %v632 = vunpack.c.h.b16 %v293
        %v633 = vunpack.c.l.b16 %v294
        %v634 = vunpack.c.h.b16 %v294
        %v635 = vunpack.c.l.b16 %v295
        %v636 = vunpack.c.h.b16 %v295
        %v637 = vunpack.c.l.b16 %v296
        %v638 = vunpack.c.h.b16 %v296
        %v639 = vunpack.c.l.b16 %v297
        %v640 = vunpack.c.h.b16 %v297
        %v641 = vunpack.c.l.b16 %v298
        %v642 = vunpack.c.h.b16 %v298
        %v643 = vunpack.c.l.b16 %v299
        %v644 = vunpack.c.h.b16 %v299
        %v645 = vunpack.c.l.b16 %v300
        %v646 = vunpack.c.h.b16 %v300
        %v647 = vunpack.c.l.b16 %v301
        %v648 = vunpack.c.h.b16 %v301
        %v649 = vunpack.c.l.b16 %v302
        %v650 = vunpack.c.h.b16 %v302
        %v651 = vunpack.c.l.b16 %v303
        %v652 = vunpack.c.h.b16 %v303
        %v653 = vunpack.c.l.b16 %v304
        %v654 = vunpack.c.h.b16 %v304
        %v655 = vunpack.c.l.b16 %v305
        %v656 = vunpack.c.h.b16 %v305
        %v657 = vunpack.c.l.b16 %v306
        %v658 = vunpack.c.h.b16 %v306
        %v659 = vunpack.c.l.b16 %v307
        %v660 = vunpack.c.h.b16 %v307
        %v661 = vunpack.c.l.b16 %v308
        %v662 = vunpack.c.h.b16 %v308
        %v663 = vunpack.c.l.b16 %v309
        %v664 = vunpack.c.h.b16 %v309
        %v665 = vunpack.c.l.b16 %v310
        %v666 = vunpack.c.h.b16 %v310
        %v667 = vunpack.c.l.b16 %v311
        %v668 = vunpack.c.h.b16 %v311
        %v669 = vunpack.c.l.b16 %v312
        %v670 = vunpack.c.h.b16 %v312
        %v671 = vunpack.c.l.b16 %v313
        %v672 = vunpack.c.h.b16 %v313
        %v673 = vunpack.c.l.b16 %v314
        %v674 = vunpack.c.h.b16 %v314
        %v675 = vpack.c.b16 %v485, %v483
        %v676 = vpack.c.b16 %v486, %v484
        %v677 = vpack.c.b16 %v489, %v487
        %v678 = vpack.c.b16 %v490, %v488
        %v679 = vpack.c.b16 %v493, %v491
        %v680 = vpack.c.b16 %v494, %v492
        %v681 = vpack.c.b16 %v497, %v495
        %v682 = vpack.c.b16 %v498, %v496
        %v683 = vpack.c.b16 %v501, %v499
        %v684 = vpack.c.b16 %v502, %v500
        %v685 = vpack.c.b16 %v505, %v503
        %v686 = vpack.c.b16 %v506, %v504
        %v687 = vpack.c.b16 %v509, %v507
        %v688 = vpack.c.b16 %v510, %v508
        %v689 = vpack.c.b16 %v513, %v511
        %v690 = vpack.c.b16 %v514, %v512
        %v691 = vpack.c.b16 %v517, %v515
        %v692 = vpack.c.b16 %v518, %v516
        %v693 = vpack.c.b16 %v521, %v519
        %v694 = vpack.c.b16 %v522, %v520
        %v695 = vpack.c.b16 %v525, %v523
        %v696 = vpack.c.b16 %v526, %v524
        %v697 = vpack.c.b16 %v529, %v527
        %v698 = vpack.c.b16 %v530, %v528
        %v699 = vpack.c.b16 %v533, %v531
        %v700 = vpack.c.b16 %v534, %v532
        %v701 = vpack.c.b16 %v537, %v535
        %v702 = vpack.c.b16 %v538, %v536
        %v703 = vpack.c.b16 %v541, %v539
        %v704 = vpack.c.b16 %v542, %v540
        %v705 = vpack.c.b16 %v545, %v543
        %v706 = vpack.c.b16 %v546, %v544
        %v707 = vpack.c.b16 %v549, %v547
        %v708 = vpack.c.b16 %v550, %v548
        %v709 = vpack.c.b16 %v553, %v551
        %v710 = vpack.c.b16 %v554, %v552
        %v711 = vpack.c.b16 %v557, %v555
        %v712 = vpack.c.b16 %v558, %v556
        %v713 = vpack.c.b16 %v561, %v559
        %v714 = vpack.c.b16 %v562, %v560
        %v715 = vpack.c.b16 %v565, %v563
        %v716 = vpack.c.b16 %v566, %v564
        %v717 = vpack.c.b16 %v569, %v567
        %v718 = vpack.c.b16 %v570, %v568
        %v719 = vpack.c.b16 %v573, %v571
        %v720 = vpack.c.b16 %v574, %v572
        %v721 = vpack.c.b16 %v577, %v575
        %v722 = vpack.c.b16 %v578, %v576
        %v723 = vpack.c.b16 %v581, %v579
        %v724 = vpack.c.b16 %v582, %v580
        %v725 = vpack.c.b16 %v585, %v583
        %v726 = vpack.c.b16 %v586, %v584
        %v727 = vpack.c.b16 %v589, %v587
        %v728 = vpack.c.b16 %v590, %v588
        %v729 = vpack.c.b16 %v593, %v591
        %v730 = vpack.c.b16 %v594, %v592
        %v731 = vpack.c.b16 %v597, %v595
        %v732 = vpack.c.b16 %v598, %v596
        %v733 = vpack.c.b16 %v601, %v599
        %v734 = vpack.c.b16 %v602, %v600
        %v735 = vpack.c.b16 %v605, %v603
        %v736 = vpack.c.b16 %v606, %v604
        %v737 = vpack.c.b16 %v609, %v607
        %v738 = vpack.c.b16 %v610, %v608
        %v739 = vpack.c.b16 %v613, %v611
        %v740 = vpack.c.b16 %v614, %v612
        %v741 = vpack.c.b16 %v617, %v615
        %v742 = vpack.c.b16 %v618, %v616
        %v743 = vpack.c.b16 %v621, %v619
        %v744 = vpack.c.b16 %v622, %v620
        %v745 = vpack.c.b16 %v625, %v623
        %v746 = vpack.c.b16 %v626, %v624
        %v747 = vpack.c.b16 %v629, %v627
        %v748 = vpack.c.b16 %v630, %v628
        %v749 = vpack.c.b16 %v633, %v631
        %v750 = vpack.c.b16 %v634, %v632
        %v751 = vpack.c.b16 %v637, %v635
        %v752 = vpack.c.b16 %v638, %v636
        %v753 = vpack.c.b16 %v641, %v639
        %v754 = vpack.c.b16 %v642, %v640
        %v755 = vpack.c.b16 %v645, %v643
        %v756 = vpack.c.b16 %v646, %v644
        %v757 = vpack.c.b16 %v649, %v647
        %v758 = vpack.c.b16 %v650, %v648
        %v759 = vpack.c.b16 %v653, %v651
        %v760 = vpack.c.b16 %v654, %v652
        %v761 = vpack.c.b16 %v657, %v655
        %v762 = vpack.c.b16 %v658, %v656
        %v763 = vpack.c.b16 %v661, %v659
        %v764 = vpack.c.b16 %v662, %v660
        %v765 = vpack.c.b16 %v665, %v663
        %v766 = vpack.c.b16 %v666, %v664
        %v767 = vpack.c.b16 %v669, %v667
        %v768 = vpack.c.b16 %v670, %v668
        %v769 = vpack.c.b16 %v673, %v671
        %v770 = vpack.c.b16 %v674, %v672
        %867 = vmatprep.subr.bf16.mxu0 %v676
        %868 = vmatpush1.bf16.msra.mxu0 %v675
        %869 = vmatprep.subr.bf16.mxu0 %v678
        %870 = vmatpush1.bf16.msra.mxu0 %v677
        %871 = vmatprep.subr.bf16.mxu0 %v680
        %872 = vmatpush1.bf16.msra.mxu0 %v679
        %873 = vmatprep.subr.bf16.mxu0 %v682
        %874 = vmatpush1.bf16.msra.mxu0 %v681
        %875 = vmatprep.subr.bf16.mxu0 %v684
        %876 = vmatpush1.bf16.msra.mxu0 %v683
        %877 = vmatprep.subr.bf16.mxu0 %v686
        %878 = vmatpush1.bf16.msra.mxu0 %v685
        %879 = vmatprep.subr.bf16.mxu0 %v688
        %880 = vmatpush1.bf16.msra.mxu0 %v687
        %881 = vmatprep.subr.bf16.mxu0 %v690
        %882 = vmatpush1.bf16.msra.mxu0 %v689
        %883 = vmatprep.subr.bf16.mxu0 %v692
        %884 = vmatpush1.bf16.msra.mxu0 %v691
        %885 = vmatprep.subr.bf16.mxu0 %v694
        %886 = vmatpush1.bf16.msra.mxu0 %v693
        %887 = vmatprep.subr.bf16.mxu0 %v696
        %888 = vmatpush1.bf16.msra.mxu0 %v695
        %889 = vmatprep.subr.bf16.mxu0 %v698
        %890 = vmatpush1.bf16.msra.mxu0 %v697
        %891 = vmatprep.subr.bf16.mxu0 %v700
        %892 = vmatpush1.bf16.msra.mxu0 %v699
        %893 = vmatprep.subr.bf16.mxu0 %v702
        %894 = vmatpush1.bf16.msra.mxu0 %v701
        %895 = vmatprep.subr.bf16.mxu0 %v704
        %896 = vmatpush1.bf16.msra.mxu0 %v703
        %897 = vmatprep.subr.bf16.mxu0 %v706
        %898 = vmatpush1.bf16.msra.mxu0 %v705
        %899 = vmatprep.mubr.bf16.mxu0 %v364
        %900 = vmatmul.mubr.bf16.gmra.mrb[0].mxu0 %v363
        %v901 = vpop.f32.mrb[0].mxu0
        %v902 = vadd.f32 %v320, %v901
        %v903 = vpop.f32.mrb[0].mxu0
        %v904 = vadd.f32 %v324, %v903
        %v905 = vpop.f32.mrb[0].mxu0
        %v906 = vadd.f32 %v320, %v905
        %v907 = vpop.f32.mrb[0].mxu0
        %v908 = vadd.f32 %v324, %v907
        %909 = vmatprep.mubr.bf16.mxu0 %v370
        %910 = vmatmul.mubr.bf16.gmra.mrb[0].mxu0 %v369
        %v911 = vpop.f32.mrb[0].mxu0
        %v912 = vadd.f32 %v320, %v911
        %v913 = vpop.f32.mrb[0].mxu0
        %v914 = vadd.f32 %v324, %v913
        %v915 = vpop.f32.mrb[0].mxu0
        %v916 = vadd.f32 %v320, %v915
        %v917 = vpop.f32.mrb[0].mxu0
        %v918 = vadd.f32 %v324, %v917
        %919 = vdwg.mxu0
        %920 = vmatprep.subr.bf16.mxu0 %v708
        %921 = vmatpush1.bf16.msra.mxu0 %v707
        %922 = vmatprep.subr.bf16.mxu0 %v710
        %923 = vmatpush1.bf16.msra.mxu0 %v709
        %924 = vmatprep.subr.bf16.mxu0 %v712
        %925 = vmatpush1.bf16.msra.mxu0 %v711
        %926 = vmatprep.subr.bf16.mxu0 %v714
        %927 = vmatpush1.bf16.msra.mxu0 %v713
        %928 = vmatprep.subr.bf16.mxu0 %v716
        %929 = vmatpush1.bf16.msra.mxu0 %v715
        %930 = vmatprep.subr.bf16.mxu0 %v718
        %931 = vmatpush1.bf16.msra.mxu0 %v717
        %932 = vmatprep.subr.bf16.mxu0 %v720
        %933 = vmatpush1.bf16.msra.mxu0 %v719
        %934 = vmatprep.subr.bf16.mxu0 %v722
        %935 = vmatpush1.bf16.msra.mxu0 %v721
        %936 = vmatprep.subr.bf16.mxu0 %v724
        %937 = vmatpush1.bf16.msra.mxu0 %v723
        %938 = vmatprep.subr.bf16.mxu0 %v726
        %939 = vmatpush1.bf16.msra.mxu0 %v725
        %940 = vmatprep.subr.bf16.mxu0 %v728
        %941 = vmatpush1.bf16.msra.mxu0 %v727
        %942 = vmatprep.subr.bf16.mxu0 %v730
        %943 = vmatpush1.bf16.msra.mxu0 %v729
        %944 = vmatprep.subr.bf16.mxu0 %v732
        %945 = vmatpush1.bf16.msra.mxu0 %v731
        %946 = vmatprep.subr.bf16.mxu0 %v734
        %947 = vmatpush1.bf16.msra.mxu0 %v733
        %948 = vmatprep.subr.bf16.mxu0 %v736
        %949 = vmatpush1.bf16.msra.mxu0 %v735
        %950 = vmatprep.subr.bf16.mxu0 %v738
        %951 = vmatpush1.bf16.msra.mxu0 %v737
        %952 = vmatprep.mubr.bf16.mxu0 %v366
        %953 = vmatmul.mubr.bf16.gmra.mrb[0].mxu0 %v365
        %v954 = vpop.f32.mrb[0].mxu0
        %v955 = vadd.f32 %v902, %v954
        %v956 = vpop.f32.mrb[0].mxu0
        %v957 = vadd.f32 %v904, %v956
        %v958 = vpop.f32.mrb[0].mxu0
        %v959 = vadd.f32 %v906, %v958
        %v960 = vpop.f32.mrb[0].mxu0
        %v961 = vadd.f32 %v908, %v960
        %962 = vmatprep.mubr.bf16.mxu0 %v372
        %963 = vmatmul.mubr.bf16.gmra.mrb[0].mxu0 %v371
        %v964 = vpop.f32.mrb[0].mxu0
        %v965 = vadd.f32 %v912, %v964
        %v966 = vpop.f32.mrb[0].mxu0
        %v967 = vadd.f32 %v914, %v966
        %v968 = vpop.f32.mrb[0].mxu0
        %v969 = vadd.f32 %v916, %v968
        %v970 = vpop.f32.mrb[0].mxu0
        %v971 = vadd.f32 %v918, %v970
        %972 = vdwg.mxu0
        %973 = vmatprep.subr.bf16.mxu0 %v740
        %974 = vmatpush1.bf16.msra.mxu0 %v739
        %975 = vmatprep.subr.bf16.mxu0 %v742
        %976 = vmatpush1.bf16.msra.mxu0 %v741
        %977 = vmatprep.subr.bf16.mxu0 %v744
        %978 = vmatpush1.bf16.msra.mxu0 %v743
        %979 = vmatprep.subr.bf16.mxu0 %v746
        %980 = vmatpush1.bf16.msra.mxu0 %v745
        %981 = vmatprep.subr.bf16.mxu0 %v748
        %982 = vmatpush1.bf16.msra.mxu0 %v747
        %983 = vmatprep.subr.bf16.mxu0 %v750
        %984 = vmatpush1.bf16.msra.mxu0 %v749
        %985 = vmatprep.subr.bf16.mxu0 %v752
        %986 = vmatpush1.bf16.msra.mxu0 %v751
        %987 = vmatprep.subr.bf16.mxu0 %v754
        %988 = vmatpush1.bf16.msra.mxu0 %v753
        %989 = vmatprep.subr.bf16.mxu0 %v756
        %990 = vmatpush1.bf16.msra.mxu0 %v755
        %991 = vmatprep.subr.bf16.mxu0 %v758
        %992 = vmatpush1.bf16.msra.mxu0 %v757
        %993 = vmatprep.subr.bf16.mxu0 %v760
        %994 = vmatpush1.bf16.msra.mxu0 %v759
        %995 = vmatprep.subr.bf16.mxu0 %v762
        %996 = vmatpush1.bf16.msra.mxu0 %v761
        %997 = vmatprep.subr.bf16.mxu0 %v764
        %998 = vmatpush1.bf16.msra.mxu0 %v763
        %999 = vmatprep.subr.bf16.mxu0 %v766
        %1000 = vmatpush1.bf16.msra.mxu0 %v765
        %1001 = vmatprep.subr.bf16.mxu0 %v768
        %1002 = vmatpush1.bf16.msra.mxu0 %v767
        %1003 = vmatprep.subr.bf16.mxu0 %v770
        %1004 = vmatpush1.bf16.msra.mxu0 %v769
        %1005 = vmatprep.mubr.bf16.mxu0 %v368
        %1006 = vmatmul.mubr.bf16.gmra.mrb[0].mxu0 %v367
        %v1007 = vpop.f32.mrb[0].mxu0
        %v1008 = vadd.f32 %v955, %v1007
        %v1009 = vpop.f32.mrb[0].mxu0
        %v1010 = vadd.f32 %v957, %v1009
        %v1011 = vpop.f32.mrb[0].mxu0
        %v1012 = vadd.f32 %v959, %v1011
        %v1013 = vpop.f32.mrb[0].mxu0
        %v1014 = vadd.f32 %v961, %v1013
        %1015 = vmatprep.mubr.bf16.mxu0 %v374
        %1016 = vmatmul.mubr.bf16.gmra.mrb[0].mxu0 %v373
        %v1017 = vpop.f32.mrb[0].mxu0
        %v1018 = vadd.f32 %v965, %v1017
        %v1019 = vpop.f32.mrb[0].mxu0
        %v1020 = vadd.f32 %v967, %v1019
        %v1021 = vpop.f32.mrb[0].mxu0
        %v1022 = vadd.f32 %v969, %v1021
        %v1023 = vpop.f32.mrb[0].mxu0
        %v1024 = vadd.f32 %v971, %v1023
        %1025 = vdwg.mxu0
        %v1026 = vpack.c.bf16 %v1012, %v1008
        %v1027 = vpack.c.bf16 %v1014, %v1010
        %v1028 = vpack.c.bf16 %v1022, %v1018
        %v1029 = vpack.c.bf16 %v1024, %v1020
        %v1034 = vunpack.c.l.b16 %v1026
        %v1035 = vunpack.c.l.b16 %v1027
        %v1036 = vunpack.c.h.b16 %v1026
        %v1037 = vunpack.c.h.b16 %v1027
        %v1038 = vunpack.c.l.b16 %v1028
        %v1039 = vunpack.c.l.b16 %v1029
        %v1040 = vunpack.c.h.b16 %v1028
        %v1041 = vunpack.c.h.b16 %v1029
        %v1042 = vpack.c.b16 %v1035, %v1034
        %v1043 = vpack.c.b16 %v1037, %v1036
        %v1044 = vpack.c.b16 %v1039, %v1038
        %v1045 = vpack.c.b16 %v1041, %v1040
        %1050 = vst [vmem:[%s204] sm:$0xff] %v1042
        %1051 = vst [vmem:[%s204 + $0x8] sm:$0xff] %v1043
        %1052 = vst [vmem:[%s204 + $0x10] sm:$0xff] %v1044
        %1053 = vst [vmem:[%s204 + $0x18] sm:$0xff] %v1045
        %s1054 = sand.u32 %s97, 1
        %s1055 = scalar_lea.sflag [#allocation4], %s1054
        %s1056 = sand.u32 %s97, 1
        %s1057 = smul.addr %s1056, 32
        %s1058 = scalar_lea.vmem [#allocation7], %s1057
        // Predicated region
        $region41: #{tpu_custom_call.1} parent=31 // pred_check
          %p1059 = pneg %p107
        $region42: #{tpu_custom_call.1} parent=31 // pred_check_branch
          %1061 = sbr.rel (%p1059) target = $region44
        $region43: #{tpu_custom_call.1} parent=31 // pred_region
          %s1062 = smul.u32 4, %s21
          %s1064 = ssub.s32 512, 512
          %1065 = vsyncadd %s1055, %s1064
          %s1066 = smul.addr %s1062, 2
          %s1067 = smul.addr %s1066, 64
          %s1068 = scalar_lea.hbm %s3, %s1067
          %s1069 = sshll.u32 %s1058, 4
          %s1070 = int_to_ptr.vmem [resolvable:$true] %s1069
          %1075 = dma.vmem_to_hbm [thread:$0]  %s1070, 512, %s1068, %s1055, 128, 128, 8
        $region44: #{tpu_custom_call.1} parent=31 // pred_fallthru
          _
      $region32: #{tpu_custom_call.1} parent=5 // pred_fallthru
        _
      %p1076 = scmp.le.s32.totalorder 2, %s16
      // Predicated region
      $region45: #{tpu_custom_call.1} parent=5 // pred_check
        %p1077 = pneg %p1076
      $region46: #{tpu_custom_call.1} parent=5 // pred_check_branch
        %1079 = sbr.rel (%p1077) target = $region48
      $region47: #{tpu_custom_call.1} parent=5 // pred_region
        %s1080 = ssub.s32 %s16, 2
        // Predicated region
        $region49: #{tpu_custom_call.1} parent=47 // pred_check
          %p1081 = pneg %p113
        $region50: #{tpu_custom_call.1} parent=47 // pred_check_branch
          %1083 = sbr.rel (%p1081) target = $region52
        $region51: #{tpu_custom_call.1} parent=47 // pred_region
          %s1084 = sand.u32 %s98, 1
          %s1085 = scalar_lea.sflag [#allocation4], %s1084
          %s1086 = sand.u32 %s98, 1
          %s1087 = smul.addr %s1086, 32
          %s1088 = scalar_lea.vmem [#allocation7], %s1087
          %1089 = dma.done %s1085, 512
        $region52: #{tpu_custom_call.1} parent=47 // pred_fallthru
          _
      $region48: #{tpu_custom_call.1} parent=5 // pred_fallthru
        _
    $region6: #{tpu_custom_call.1} parent=1 // loop_footer
      %s20 = sadd.s32 1, %s16
    $region7: #{tpu_custom_call.1} parent=1 // loop_footer_branch
      %15 = sbr.rel target = $region3
    $region8: #{tpu_custom_call.1} parent=1 // loop_exit
      _
    %1090 = vsyncpa [#allocation3], 1
    %s1091 = scalar_lea.sflag [#allocation3], 1
    %1092 = vsyncpa %s1091, 1
    %1093 = vsyncpa [#allocation6], 1
    %1094 = vsyncpa [#allocation4], 1
    %s1095 = scalar_lea.sflag [#allocation4], 1
    %1096 = vsyncpa %s1095, 1

</llo_original>
